<compile_context>
chip_gen: v6e
topology: v6e:2x2x1
jax: 0.10.0
libtpu: 0.0.40
codegen_flags: <defaults>
</compile_context>

<pallas_src>
import functools

import jax
import jax.numpy as jnp
from jax import lax
from jax.experimental import pallas as pl
from jax.experimental.pallas import tpu as pltpu

# ---- spline grid constants -------------------------------------------------
XMIN = -1.0
XMAX = 1.0
_SUB = 8          # sublane-sized batch slab processed at a time inside a tile
_TFC = 8          # out-feature chunk processed at a time (keeps vregs small)


def _kan_kernel(x_ref, w_ref, b_ref, c_ref, o_ref, *, n_seg, inv_h, tb, tf, tfc):
    """One (tb, tf) output tile, accumulating over the Fin grid axis.

    x_ref : (tb, tk)           input tile
    w_ref : (tf, tk)           outer-weight tile
    b_ref : (1, tf)            bias tile
    c_ref : (4, S, tf, tk)     fused per-segment cubic coefficient tile
    o_ref : (tb, tf) f32       output tile; doubles as the accumulator
                               (resident across the Fin grid axis)
    """
    kidx = pl.program_id(2)

    # Initialize the resident output block with the bias on the first k step.
    @pl.when(kidx == 0)
    def _():
        o_ref[...] = jnp.broadcast_to(b_ref[...], o_ref.shape)

    n_slab = tb // _SUB

    # Static Python loop over out-feature chunks (static lane offsets),
    # rolled fori_loop over 8-row batch slabs (dynamic sublane offsets only).
    for off_f in range(0, tf, tfc):
        w_c = w_ref[pl.ds(off_f, tfc), :]                        # (tfc, tk)

        def slab_body(bi, carry, off_f=off_f, w_c=w_c):
            off_b = pl.multiple_of(bi * _SUB, _SUB)
            xb = x_ref[pl.ds(off_b, _SUB), :]                    # (8, tk)

            # Weighted input, clamp, segment index and local coordinate.
            z = xb[:, None, :] * w_c[None, :, :]                 # (8, tfc, tk)
            u = (jnp.clip(z, XMIN, XMAX) - XMIN) * inv_h
            seg = jnp.clip(jnp.floor(u), 0.0, float(n_seg - 1))  # f32, exact
            t = u - seg                                          # in [0, 1]

            # Select the segment's coefficients: one compare per segment
            # shared by the 4 selects, then a single Horner evaluation.
            c0 = c_ref[0, 0, pl.ds(off_f, tfc), :][None]         # (1, tfc, tk)
            c1 = c_ref[1, 0, pl.ds(off_f, tfc), :][None]
            c2 = c_ref[2, 0, pl.ds(off_f, tfc), :][None]
            c3 = c_ref[3, 0, pl.ds(off_f, tfc), :][None]
            for kk in range(1, n_seg):
                m = seg == float(kk)
                c0 = jnp.where(m, c_ref[0, kk, pl.ds(off_f, tfc), :][None], c0)
                c1 = jnp.where(m, c_ref[1, kk, pl.ds(off_f, tfc), :][None], c1)
                c2 = jnp.where(m, c_ref[2, kk, pl.ds(off_f, tfc), :][None], c2)
                c3 = jnp.where(m, c_ref[3, kk, pl.ds(off_f, tfc), :][None], c3)

            poly = c0 + t * (c1 + t * (c2 + t * c3))             # (8, tfc, tk)

            # Fold the Fin reduction into the resident output block.
            contrib = jnp.sum(poly, axis=-1)                     # (8, tfc)
            cur = o_ref[pl.ds(off_b, _SUB), pl.ds(off_f, tfc)]
            o_ref[pl.ds(off_b, _SUB), pl.ds(off_f, tfc)] = cur + contrib
            return carry

        lax.fori_loop(0, n_slab, slab_body, 0)


def _round_up(x, m):
    return ((x + m - 1) // m) * m


def _vmem_limit_bytes():
    """Per-generation VMEM budget: ~96 MiB on v5e/v6e (128 MiB), ~48 MiB on v7x."""
    try:
        cap = int(pltpu.get_tpu_info().vmem_capacity_bytes)
    except Exception:
        cap = 64 * 1024 * 1024      # conservative (v7x-sized) fallback
    return min((cap * 3) // 4, 100 * 1024 * 1024)


def kan_layer_efficient(x, weights, bias, coefs, *, grid_size,
                        tb=None, tf=None, tk=128):
    """x: (B, Fin) f32; weights: (Fout, Fin); bias: (Fout,);
    coefs: (4, S, Fout, Fin) with S = grid_size - 1. Returns (B, Fout) f32."""
    B, Fin = x.shape
    Fout = weights.shape[0]
    S = grid_size - 1
    h = (XMAX - XMIN) / (grid_size - 1)
    inv_h = 1.0 / h

    # ---- tiling: lane-dense Fin/Fout, sublane-aligned batch -----------------
    tk = max(128, _round_up(tk, 128))
    if tf is None:
        # tf == Fout_p when Fout <= 128 (legal narrow lane block); else 128.
        tf = _round_up(Fout, _SUB) if Fout <= 128 else 128
    tf = _round_up(tf, _SUB)
    if tb is None:
        tb = min(256, _round_up(B, _SUB))   # big tb cuts coef HBM re-streaming
    tb = _round_up(tb, _SUB)
    assert tb % _SUB == 0 and tf % _SUB == 0

    Fin_p = _round_up(Fin, tk)
    Fout_p = _round_up(Fout, tf)
    B_p = _round_up(B, tb)
    tfc = min(_TFC, tf)

    # ---- VMEM budget (double-buffered blocks; coefficients dominate) --------
    vmem_limit = _vmem_limit_bytes()
    need = (2 * (4 * S * tf * tk + tb * tk + tf * tk + tf) * 4
            + 2 * tb * tf * 4 + (4 << 20))
    vmem_limit = max(vmem_limit, min(need, 120 * 1024 * 1024))
    # TODO(synk): for very large grid_size with Fout > 128 the double-buffered
    # coefficient block may not fit v7x's 64 MiB VMEM; would need an S-chunked
    # grid axis in that corner case.

    # Zero padding: padded in_features get all-zero spline coefficients so
    # their contribution is exactly 0; padded batch rows / out_features are
    # sliced away after the call.
    xp = jnp.zeros((B_p, Fin_p), jnp.float32).at[:B, :Fin].set(
        x.astype(jnp.float32))
    wp = jnp.zeros((Fout_p, Fin_p), jnp.float32).at[:Fout, :Fin].set(
        weights.astype(jnp.float32))
    bp = jnp.zeros((1, Fout_p), jnp.float32).at[0, :Fout].set(
        bias.astype(jnp.float32))
    cp = jnp.zeros((4, S, Fout_p, Fin_p), jnp.float32).at[
        :, :, :Fout, :Fin].set(coefs.astype(jnp.float32))

    grid = (Fout_p // tf, B_p // tb, Fin_p // tk)
    kernel = functools.partial(_kan_kernel, n_seg=S, inv_h=inv_h,
                               tb=tb, tf=tf, tfc=tfc)

    out_p = pl.pallas_call(
        kernel,
        out_shape=jax.ShapeDtypeStruct((B_p, Fout_p), jnp.float32),
        grid_spec=pltpu.PrefetchScalarGridSpec(
            num_scalar_prefetch=0,
            grid=grid,
            in_specs=[
                pl.BlockSpec((tb, tk), lambda fo, b, k: (b, k)),        # x
                pl.BlockSpec((tf, tk), lambda fo, b, k: (fo, k)),       # W
                pl.BlockSpec((1, tf), lambda fo, b, k: (0, fo)),        # bias
                pl.BlockSpec((4, S, tf, tk),
                             lambda fo, b, k: (0, 0, fo, k)),           # coefs
            ],
            out_specs=pl.BlockSpec((tb, tf), lambda fo, b, k: (b, fo)),
        ),
        compiler_params=pltpu.CompilerParams(
            dimension_semantics=("parallel", "parallel", "arbitrary"),
            vmem_limit_bytes=int(vmem_limit),
        ),
    )(xp, wp, bp, cp)

    return out_p[:B, :Fout]


# ---- pure-JAX reference (mirrors the PyTorch per-(i,j) loop) ---------------
def kan_reference(x, weights, bias, coefs, *, grid_size):
    S = grid_size - 1
    h = (XMAX - XMIN) / (grid_size - 1)
    inv_h = 1.0 / h
    z = x[:, None, :] * weights[None, :, :]              # (B, Fout, Fin)
    u = (jnp.clip(z, XMIN, XMAX) - XMIN) * inv_h
    seg = jnp.clip(jnp.floor(u), 0.0, float(S - 1))
    t = u - seg
    segi = seg.astype(jnp.int32)
    i_idx = jnp.arange(weights.shape[0])[None, :, None]
    j_idx = jnp.arange(weights.shape[1])[None, None, :]
    c0 = coefs[0][segi, i_idx, j_idx]
    c1 = coefs[1][segi, i_idx, j_idx]
    c2 = coefs[2][segi, i_idx, j_idx]
    c3 = coefs[3][segi, i_idx, j_idx]
    poly = c0 + t * (c1 + t * (c2 + t * c3))
    return jnp.sum(poly, axis=-1) + bias[None, :]


if __name__ == "__main__":
    B, Fin, Fout, G = 8, 16, 8, 10
    S = G - 1

    key = jax.random.PRNGKey(0)
    kx, kw, kc = jax.random.split(key, 3)

    x = jax.random.normal(kx, (B, Fin), dtype=jnp.float32)

    # kaiming_uniform_(a=1): bound = sqrt(6 / ((1 + a^2) * fan_in)) = sqrt(3/fan_in)
    bound = (3.0 / Fin) ** 0.5
    weights = jax.random.uniform(kw, (Fout, Fin), jnp.float32, -bound, bound)
    bias = jnp.zeros((Fout,), jnp.float32)

    # per-(out, in) spline: S segments x 4 cubic coefficients
    coefs = jax.random.uniform(kc, (4, S, Fout, Fin), jnp.float32, -0.5, 0.5)

    out = kan_layer_efficient(x, weights, bias, coefs, grid_size=G)
    out = jax.block_until_ready(out)

    ref = kan_reference(x, weights, bias, coefs, grid_size=G)
    assert out.shape == (B, Fout)
    assert jnp.allclose(out, ref, atol=1e-4, rtol=1e-4), "mismatch vs reference"

    print("KERNEL_OK")
</pallas_src>

<mosaic_0001>
module attributes {stable_mosaic.version = 11 : i64} {
  func.func @_kan_kernel(%arg0: i32, %arg1: i32, %arg2: i32, %arg3: memref<8x128xf32, #tpu.memory_space<vmem>>, %arg4: memref<8x128xf32, #tpu.memory_space<vmem>>, %arg5: memref<1x8xf32, #tpu.memory_space<vmem>>, %arg6: memref<4x9x8x128xf32, #tpu.memory_space<vmem>>, %arg7: memref<8x8xf32, #tpu.memory_space<vmem>>) attributes {dimension_semantics = [#tpu.dimension_semantics<parallel>, #tpu.dimension_semantics<parallel>, #tpu.dimension_semantics<arbitrary>], iteration_bounds = array<i64: 1, 1, 1>, scalar_prefetch = 0 : i64, scratch_operands = 0 : i64, tpu.core_type = #tpu.core_type<tc>, window_params = [{transform_indices = @transform_0, window_bounds = array<i64: 8, 128>}, {transform_indices = @transform_1, window_bounds = array<i64: 8, 128>}, {transform_indices = @transform_2, window_bounds = array<i64: 1, 8>}, {transform_indices = @transform_3, window_bounds = array<i64: 4, 9, 8, 128>}, {transform_indices = @transform_4, window_bounds = array<i64: 8, 8>}]} {
    %c0_i32 = arith.constant 0 : i32
    %0 = arith.cmpi eq, %arg2, %c0_i32 : i32
    %1 = arith.extui %0 : i1 to i32
    %c0_i32_0 = arith.constant 0 : i32
    %2 = arith.cmpi ne, %1, %c0_i32_0 : i32
    scf.if %2 {
      %c0_156 = arith.constant 0 : index
      %c0_157 = arith.constant 0 : index
      %267 = vector.load %arg5[%c0_156, %c0_157] : memref<1x8xf32, #tpu.memory_space<vmem>>, vector<1x8xf32>
      %268 = vector.shape_cast %267 : vector<1x8xf32> to vector<1x8xf32>
      %269 = vector.broadcast %268 : vector<1x8xf32> to vector<8x8xf32>
      %c0_158 = arith.constant 0 : index
      %c0_159 = arith.constant 0 : index
      %270 = vector.load %arg7[%c0_158, %c0_159] : memref<8x8xf32, #tpu.memory_space<vmem>>, vector<8x8xf32>
      tpu.vector_store %arg7[%c0_158, %c0_159], %269 {strides = array<i32>} : memref<8x8xf32, #tpu.memory_space<vmem>>, vector<8x8xf32>,
    } else {
    }
    %c0 = arith.constant 0 : index
    %c0_1 = arith.constant 0 : index
    %3 = vector.load %arg4[%c0, %c0_1] : memref<8x128xf32, #tpu.memory_space<vmem>>, vector<8x128xf32>
    %c0_i32_2 = arith.constant 0 : i32
    %c8_i32 = arith.constant 8 : i32
    %4 = arith.muli %c0_i32_2, %c8_i32 : i32
    %5 = tpu.assume_multiple %4, 8 : i32
    %6 = arith.index_cast %5 : i32 to index
    %c0_3 = arith.constant 0 : index
    %7 = vector.load %arg3[%6, %c0_3] : memref<8x128xf32, #tpu.memory_space<vmem>>, vector<8x128xf32>
    %8 = vector.shape_cast %7 : vector<8x128xf32> to vector<8x1x128xf32>
    %9 = vector.shape_cast %3 : vector<8x128xf32> to vector<1x8x128xf32>
    %10 = vector.broadcast %8 : vector<8x1x128xf32> to vector<8x8x128xf32>
    %11 = vector.broadcast %9 : vector<1x8x128xf32> to vector<8x8x128xf32>
    %12 = arith.mulf %10, %11 : vector<8x8x128xf32>
    %cst = arith.constant -1.000000e+00 : f32
    %cst_4 = arith.constant 1.000000e+00 : f32
    %13 = vector.broadcast %cst : f32 to vector<8x8x128xf32>
    %14 = arith.maximumf %13, %12 : vector<8x8x128xf32>
    %15 = vector.broadcast %cst_4 : f32 to vector<8x8x128xf32>
    %16 = arith.minimumf %15, %14 : vector<8x8x128xf32>
    %cst_5 = arith.constant -1.000000e+00 : f32
    %17 = vector.broadcast %cst_5 : f32 to vector<8x8x128xf32>
    %18 = arith.subf %16, %17 : vector<8x8x128xf32>
    %cst_6 = arith.constant 4.500000e+00 : f32
    %19 = vector.broadcast %cst_6 : f32 to vector<8x8x128xf32>
    %20 = arith.mulf %18, %19 : vector<8x8x128xf32>
    %21 = math.floor %20 : vector<8x8x128xf32>
    %cst_7 = arith.constant 0.000000e+00 : f32
    %cst_8 = arith.constant 8.000000e+00 : f32
    %22 = vector.broadcast %cst_7 : f32 to vector<8x8x128xf32>
    %23 = arith.maximumf %22, %21 : vector<8x8x128xf32>
    %24 = vector.broadcast %cst_8 : f32 to vector<8x8x128xf32>
    %25 = arith.minimumf %24, %23 : vector<8x8x128xf32>
    %26 = arith.subf %20, %25 : vector<8x8x128xf32>
    %c0_9 = arith.constant 0 : index
    %c0_10 = arith.constant 0 : index
    %c0_11 = arith.constant 0 : index
    %c0_12 = arith.constant 0 : index
    %27 = vector.load %arg6[%c0_9, %c0_10, %c0_11, %c0_12] : memref<4x9x8x128xf32, #tpu.memory_space<vmem>>, vector<1x1x8x128xf32>
    %28 = vector.shape_cast %27 : vector<1x1x8x128xf32> to vector<8x128xf32>
    %29 = vector.shape_cast %28 : vector<8x128xf32> to vector<1x8x128xf32>
    %c1 = arith.constant 1 : index
    %c0_13 = arith.constant 0 : index
    %c0_14 = arith.constant 0 : index
    %c0_15 = arith.constant 0 : index
    %30 = vector.load %arg6[%c1, %c0_13, %c0_14, %c0_15] : memref<4x9x8x128xf32, #tpu.memory_space<vmem>>, vector<1x1x8x128xf32>
    %31 = vector.shape_cast %30 : vector<1x1x8x128xf32> to vector<8x128xf32>
    %32 = vector.shape_cast %31 : vector<8x128xf32> to vector<1x8x128xf32>
    %c2 = arith.constant 2 : index
    %c0_16 = arith.constant 0 : index
    %c0_17 = arith.constant 0 : index
    %c0_18 = arith.constant 0 : index
    %33 = vector.load %arg6[%c2, %c0_16, %c0_17, %c0_18] : memref<4x9x8x128xf32, #tpu.memory_space<vmem>>, vector<1x1x8x128xf32>
    %34 = vector.shape_cast %33 : vector<1x1x8x128xf32> to vector<8x128xf32>
    %35 = vector.shape_cast %34 : vector<8x128xf32> to vector<1x8x128xf32>
    %c3 = arith.constant 3 : index
    %c0_19 = arith.constant 0 : index
    %c0_20 = arith.constant 0 : index
    %c0_21 = arith.constant 0 : index
    %36 = vector.load %arg6[%c3, %c0_19, %c0_20, %c0_21] : memref<4x9x8x128xf32, #tpu.memory_space<vmem>>, vector<1x1x8x128xf32>
    %37 = vector.shape_cast %36 : vector<1x1x8x128xf32> to vector<8x128xf32>
    %38 = vector.shape_cast %37 : vector<8x128xf32> to vector<1x8x128xf32>
    %cst_22 = arith.constant 1.000000e+00 : f32
    %39 = vector.broadcast %cst_22 : f32 to vector<8x8x128xf32>
    %40 = arith.cmpf oeq, %25, %39 : vector<8x8x128xf32>
    %c0_23 = arith.constant 0 : index
    %c1_24 = arith.constant 1 : index
    %c0_25 = arith.constant 0 : index
    %c0_26 = arith.constant 0 : index
    %41 = vector.load %arg6[%c0_23, %c1_24, %c0_25, %c0_26] : memref<4x9x8x128xf32, #tpu.memory_space<vmem>>, vector<1x1x8x128xf32>
    %42 = vector.shape_cast %41 : vector<1x1x8x128xf32> to vector<8x128xf32>
    %43 = vector.shape_cast %42 : vector<8x128xf32> to vector<1x8x128xf32>
    %44 = vector.shape_cast %43 : vector<1x8x128xf32> to vector<1x8x128xf32>
    %45 = vector.broadcast %44 : vector<1x8x128xf32> to vector<8x8x128xf32>
    %46 = vector.shape_cast %29 : vector<1x8x128xf32> to vector<1x8x128xf32>
    %47 = vector.broadcast %46 : vector<1x8x128xf32> to vector<8x8x128xf32>
    %48 = arith.select %40, %45, %47 : vector<8x8x128xi1>, vector<8x8x128xf32>
    %c1_27 = arith.constant 1 : index
    %c1_28 = arith.constant 1 : index
    %c0_29 = arith.constant 0 : index
    %c0_30 = arith.constant 0 : index
    %49 = vector.load %arg6[%c1_27, %c1_28, %c0_29, %c0_30] : memref<4x9x8x128xf32, #tpu.memory_space<vmem>>, vector<1x1x8x128xf32>
    %50 = vector.shape_cast %49 : vector<1x1x8x128xf32> to vector<8x128xf32>
    %51 = vector.shape_cast %50 : vector<8x128xf32> to vector<1x8x128xf32>
    %52 = vector.shape_cast %51 : vector<1x8x128xf32> to vector<1x8x128xf32>
    %53 = vector.broadcast %52 : vector<1x8x128xf32> to vector<8x8x128xf32>
    %54 = vector.shape_cast %32 : vector<1x8x128xf32> to vector<1x8x128xf32>
    %55 = vector.broadcast %54 : vector<1x8x128xf32> to vector<8x8x128xf32>
    %56 = arith.select %40, %53, %55 : vector<8x8x128xi1>, vector<8x8x128xf32>
    %c2_31 = arith.constant 2 : index
    %c1_32 = arith.constant 1 : index
    %c0_33 = arith.constant 0 : index
    %c0_34 = arith.constant 0 : index
    %57 = vector.load %arg6[%c2_31, %c1_32, %c0_33, %c0_34] : memref<4x9x8x128xf32, #tpu.memory_space<vmem>>, vector<1x1x8x128xf32>
    %58 = vector.shape_cast %57 : vector<1x1x8x128xf32> to vector<8x128xf32>
    %59 = vector.shape_cast %58 : vector<8x128xf32> to vector<1x8x128xf32>
    %60 = vector.shape_cast %59 : vector<1x8x128xf32> to vector<1x8x128xf32>
    %61 = vector.broadcast %60 : vector<1x8x128xf32> to vector<8x8x128xf32>
    %62 = vector.shape_cast %35 : vector<1x8x128xf32> to vector<1x8x128xf32>
    %63 = vector.broadcast %62 : vector<1x8x128xf32> to vector<8x8x128xf32>
    %64 = arith.select %40, %61, %63 : vector<8x8x128xi1>, vector<8x8x128xf32>
    %c3_35 = arith.constant 3 : index
    %c1_36 = arith.constant 1 : index
    %c0_37 = arith.constant 0 : index
    %c0_38 = arith.constant 0 : index
    %65 = vector.load %arg6[%c3_35, %c1_36, %c0_37, %c0_38] : memref<4x9x8x128xf32, #tpu.memory_space<vmem>>, vector<1x1x8x128xf32>
    %66 = vector.shape_cast %65 : vector<1x1x8x128xf32> to vector<8x128xf32>
    %67 = vector.shape_cast %66 : vector<8x128xf32> to vector<1x8x128xf32>
    %68 = vector.shape_cast %67 : vector<1x8x128xf32> to vector<1x8x128xf32>
    %69 = vector.broadcast %68 : vector<1x8x128xf32> to vector<8x8x128xf32>
    %70 = vector.shape_cast %38 : vector<1x8x128xf32> to vector<1x8x128xf32>
    %71 = vector.broadcast %70 : vector<1x8x128xf32> to vector<8x8x128xf32>
    %72 = arith.select %40, %69, %71 : vector<8x8x128xi1>, vector<8x8x128xf32>
    %cst_39 = arith.constant 2.000000e+00 : f32
    %73 = vector.broadcast %cst_39 : f32 to vector<8x8x128xf32>
    %74 = arith.cmpf oeq, %25, %73 : vector<8x8x128xf32>
    %c0_40 = arith.constant 0 : index
    %c2_41 = arith.constant 2 : index
    %c0_42 = arith.constant 0 : index
    %c0_43 = arith.constant 0 : index
    %75 = vector.load %arg6[%c0_40, %c2_41, %c0_42, %c0_43] : memref<4x9x8x128xf32, #tpu.memory_space<vmem>>, vector<1x1x8x128xf32>
    %76 = vector.shape_cast %75 : vector<1x1x8x128xf32> to vector<8x128xf32>
    %77 = vector.shape_cast %76 : vector<8x128xf32> to vector<1x8x128xf32>
    %78 = vector.shape_cast %77 : vector<1x8x128xf32> to vector<1x8x128xf32>
    %79 = vector.broadcast %78 : vector<1x8x128xf32> to vector<8x8x128xf32>
    %80 = arith.select %74, %79, %48 : vector<8x8x128xi1>, vector<8x8x128xf32>
    %c1_44 = arith.constant 1 : index
    %c2_45 = arith.constant 2 : index
    %c0_46 = arith.constant 0 : index
    %c0_47 = arith.constant 0 : index
    %81 = vector.load %arg6[%c1_44, %c2_45, %c0_46, %c0_47] : memref<4x9x8x128xf32, #tpu.memory_space<vmem>>, vector<1x1x8x128xf32>
    %82 = vector.shape_cast %81 : vector<1x1x8x128xf32> to vector<8x128xf32>
    %83 = vector.shape_cast %82 : vector<8x128xf32> to vector<1x8x128xf32>
    %84 = vector.shape_cast %83 : vector<1x8x128xf32> to vector<1x8x128xf32>
    %85 = vector.broadcast %84 : vector<1x8x128xf32> to vector<8x8x128xf32>
    %86 = arith.select %74, %85, %56 : vector<8x8x128xi1>, vector<8x8x128xf32>
    %c2_48 = arith.constant 2 : index
    %c2_49 = arith.constant 2 : index
    %c0_50 = arith.constant 0 : index
    %c0_51 = arith.constant 0 : index
    %87 = vector.load %arg6[%c2_48, %c2_49, %c0_50, %c0_51] : memref<4x9x8x128xf32, #tpu.memory_space<vmem>>, vector<1x1x8x128xf32>
    %88 = vector.shape_cast %87 : vector<1x1x8x128xf32> to vector<8x128xf32>
    %89 = vector.shape_cast %88 : vector<8x128xf32> to vector<1x8x128xf32>
    %90 = vector.shape_cast %89 : vector<1x8x128xf32> to vector<1x8x128xf32>
    %91 = vector.broadcast %90 : vector<1x8x128xf32> to vector<8x8x128xf32>
    %92 = arith.select %74, %91, %64 : vector<8x8x128xi1>, vector<8x8x128xf32>
    %c3_52 = arith.constant 3 : index
    %c2_53 = arith.constant 2 : index
    %c0_54 = arith.constant 0 : index
    %c0_55 = arith.constant 0 : index
    %93 = vector.load %arg6[%c3_52, %c2_53, %c0_54, %c0_55] : memref<4x9x8x128xf32, #tpu.memory_space<vmem>>, vector<1x1x8x128xf32>
    %94 = vector.shape_cast %93 : vector<1x1x8x128xf32> to vector<8x128xf32>
    %95 = vector.shape_cast %94 : vector<8x128xf32> to vector<1x8x128xf32>
    %96 = vector.shape_cast %95 : vector<1x8x128xf32> to vector<1x8x128xf32>
    %97 = vector.broadcast %96 : vector<1x8x128xf32> to vector<8x8x128xf32>
    %98 = arith.select %74, %97, %72 : vector<8x8x128xi1>, vector<8x8x128xf32>
    %cst_56 = arith.constant 3.000000e+00 : f32
    %99 = vector.broadcast %cst_56 : f32 to vector<8x8x128xf32>
    %100 = arith.cmpf oeq, %25, %99 : vector<8x8x128xf32>
    %c0_57 = arith.constant 0 : index
    %c3_58 = arith.constant 3 : index
    %c0_59 = arith.constant 0 : index
    %c0_60 = arith.constant 0 : index
    %101 = vector.load %arg6[%c0_57, %c3_58, %c0_59, %c0_60] : memref<4x9x8x128xf32, #tpu.memory_space<vmem>>, vector<1x1x8x128xf32>
    %102 = vector.shape_cast %101 : vector<1x1x8x128xf32> to vector<8x128xf32>
    %103 = vector.shape_cast %102 : vector<8x128xf32> to vector<1x8x128xf32>
    %104 = vector.shape_cast %103 : vector<1x8x128xf32> to vector<1x8x128xf32>
    %105 = vector.broadcast %104 : vector<1x8x128xf32> to vector<8x8x128xf32>
    %106 = arith.select %100, %105, %80 : vector<8x8x128xi1>, vector<8x8x128xf32>
    %c1_61 = arith.constant 1 : index
    %c3_62 = arith.constant 3 : index
    %c0_63 = arith.constant 0 : index
    %c0_64 = arith.constant 0 : index
    %107 = vector.load %arg6[%c1_61, %c3_62, %c0_63, %c0_64] : memref<4x9x8x128xf32, #tpu.memory_space<vmem>>, vector<1x1x8x128xf32>
    %108 = vector.shape_cast %107 : vector<1x1x8x128xf32> to vector<8x128xf32>
    %109 = vector.shape_cast %108 : vector<8x128xf32> to vector<1x8x128xf32>
    %110 = vector.shape_cast %109 : vector<1x8x128xf32> to vector<1x8x128xf32>
    %111 = vector.broadcast %110 : vector<1x8x128xf32> to vector<8x8x128xf32>
    %112 = arith.select %100, %111, %86 : vector<8x8x128xi1>, vector<8x8x128xf32>
    %c2_65 = arith.constant 2 : index
    %c3_66 = arith.constant 3 : index
    %c0_67 = arith.constant 0 : index
    %c0_68 = arith.constant 0 : index
    %113 = vector.load %arg6[%c2_65, %c3_66, %c0_67, %c0_68] : memref<4x9x8x128xf32, #tpu.memory_space<vmem>>, vector<1x1x8x128xf32>
    %114 = vector.shape_cast %113 : vector<1x1x8x128xf32> to vector<8x128xf32>
    %115 = vector.shape_cast %114 : vector<8x128xf32> to vector<1x8x128xf32>
    %116 = vector.shape_cast %115 : vector<1x8x128xf32> to vector<1x8x128xf32>
    %117 = vector.broadcast %116 : vector<1x8x128xf32> to vector<8x8x128xf32>
    %118 = arith.select %100, %117, %92 : vector<8x8x128xi1>, vector<8x8x128xf32>
    %c3_69 = arith.constant 3 : index
    %c3_70 = arith.constant 3 : index
    %c0_71 = arith.constant 0 : index
    %c0_72 = arith.constant 0 : index
    %119 = vector.load %arg6[%c3_69, %c3_70, %c0_71, %c0_72] : memref<4x9x8x128xf32, #tpu.memory_space<vmem>>, vector<1x1x8x128xf32>
    %120 = vector.shape_cast %119 : vector<1x1x8x128xf32> to vector<8x128xf32>
    %121 = vector.shape_cast %120 : vector<8x128xf32> to vector<1x8x128xf32>
    %122 = vector.shape_cast %121 : vector<1x8x128xf32> to vector<1x8x128xf32>
    %123 = vector.broadcast %122 : vector<1x8x128xf32> to vector<8x8x128xf32>
    %124 = arith.select %100, %123, %98 : vector<8x8x128xi1>, vector<8x8x128xf32>
    %cst_73 = arith.constant 4.000000e+00 : f32
    %125 = vector.broadcast %cst_73 : f32 to vector<8x8x128xf32>
    %126 = arith.cmpf oeq, %25, %125 : vector<8x8x128xf32>
    %c0_74 = arith.constant 0 : index
    %c4 = arith.constant 4 : index
    %c0_75 = arith.constant 0 : index
    %c0_76 = arith.constant 0 : index
    %127 = vector.load %arg6[%c0_74, %c4, %c0_75, %c0_76] : memref<4x9x8x128xf32, #tpu.memory_space<vmem>>, vector<1x1x8x128xf32>
    %128 = vector.shape_cast %127 : vector<1x1x8x128xf32> to vector<8x128xf32>
    %129 = vector.shape_cast %128 : vector<8x128xf32> to vector<1x8x128xf32>
    %130 = vector.shape_cast %129 : vector<1x8x128xf32> to vector<1x8x128xf32>
    %131 = vector.broadcast %130 : vector<1x8x128xf32> to vector<8x8x128xf32>
    %132 = arith.select %126, %131, %106 : vector<8x8x128xi1>, vector<8x8x128xf32>
    %c1_77 = arith.constant 1 : index
    %c4_78 = arith.constant 4 : index
    %c0_79 = arith.constant 0 : index
    %c0_80 = arith.constant 0 : index
    %133 = vector.load %arg6[%c1_77, %c4_78, %c0_79, %c0_80] : memref<4x9x8x128xf32, #tpu.memory_space<vmem>>, vector<1x1x8x128xf32>
    %134 = vector.shape_cast %133 : vector<1x1x8x128xf32> to vector<8x128xf32>
    %135 = vector.shape_cast %134 : vector<8x128xf32> to vector<1x8x128xf32>
    %136 = vector.shape_cast %135 : vector<1x8x128xf32> to vector<1x8x128xf32>
    %137 = vector.broadcast %136 : vector<1x8x128xf32> to vector<8x8x128xf32>
    %138 = arith.select %126, %137, %112 : vector<8x8x128xi1>, vector<8x8x128xf32>
    %c2_81 = arith.constant 2 : index
    %c4_82 = arith.constant 4 : index
    %c0_83 = arith.constant 0 : index
    %c0_84 = arith.constant 0 : index
    %139 = vector.load %arg6[%c2_81, %c4_82, %c0_83, %c0_84] : memref<4x9x8x128xf32, #tpu.memory_space<vmem>>, vector<1x1x8x128xf32>
    %140 = vector.shape_cast %139 : vector<1x1x8x128xf32> to vector<8x128xf32>
    %141 = vector.shape_cast %140 : vector<8x128xf32> to vector<1x8x128xf32>
    %142 = vector.shape_cast %141 : vector<1x8x128xf32> to vector<1x8x128xf32>
    %143 = vector.broadcast %142 : vector<1x8x128xf32> to vector<8x8x128xf32>
    %144 = arith.select %126, %143, %118 : vector<8x8x128xi1>, vector<8x8x128xf32>
    %c3_85 = arith.constant 3 : index
    %c4_86 = arith.constant 4 : index
    %c0_87 = arith.constant 0 : index
    %c0_88 = arith.constant 0 : index
    %145 = vector.load %arg6[%c3_85, %c4_86, %c0_87, %c0_88] : memref<4x9x8x128xf32, #tpu.memory_space<vmem>>, vector<1x1x8x128xf32>
    %146 = vector.shape_cast %145 : vector<1x1x8x128xf32> to vector<8x128xf32>
    %147 = vector.shape_cast %146 : vector<8x128xf32> to vector<1x8x128xf32>
    %148 = vector.shape_cast %147 : vector<1x8x128xf32> to vector<1x8x128xf32>
    %149 = vector.broadcast %148 : vector<1x8x128xf32> to vector<8x8x128xf32>
    %150 = arith.select %126, %149, %124 : vector<8x8x128xi1>, vector<8x8x128xf32>
    %cst_89 = arith.constant 5.000000e+00 : f32
    %151 = vector.broadcast %cst_89 : f32 to vector<8x8x128xf32>
    %152 = arith.cmpf oeq, %25, %151 : vector<8x8x128xf32>
    %c0_90 = arith.constant 0 : index
    %c5 = arith.constant 5 : index
    %c0_91 = arith.constant 0 : index
    %c0_92 = arith.constant 0 : index
    %153 = vector.load %arg6[%c0_90, %c5, %c0_91, %c0_92] : memref<4x9x8x128xf32, #tpu.memory_space<vmem>>, vector<1x1x8x128xf32>
    %154 = vector.shape_cast %153 : vector<1x1x8x128xf32> to vector<8x128xf32>
    %155 = vector.shape_cast %154 : vector<8x128xf32> to vector<1x8x128xf32>
    %156 = vector.shape_cast %155 : vector<1x8x128xf32> to vector<1x8x128xf32>
    %157 = vector.broadcast %156 : vector<1x8x128xf32> to vector<8x8x128xf32>
    %158 = arith.select %152, %157, %132 : vector<8x8x128xi1>, vector<8x8x128xf32>
    %c1_93 = arith.constant 1 : index
    %c5_94 = arith.constant 5 : index
    %c0_95 = arith.constant 0 : index
    %c0_96 = arith.constant 0 : index
    %159 = vector.load %arg6[%c1_93, %c5_94, %c0_95, %c0_96] : memref<4x9x8x128xf32, #tpu.memory_space<vmem>>, vector<1x1x8x128xf32>
    %160 = vector.shape_cast %159 : vector<1x1x8x128xf32> to vector<8x128xf32>
    %161 = vector.shape_cast %160 : vector<8x128xf32> to vector<1x8x128xf32>
    %162 = vector.shape_cast %161 : vector<1x8x128xf32> to vector<1x8x128xf32>
    %163 = vector.broadcast %162 : vector<1x8x128xf32> to vector<8x8x128xf32>
    %164 = arith.select %152, %163, %138 : vector<8x8x128xi1>, vector<8x8x128xf32>
    %c2_97 = arith.constant 2 : index
    %c5_98 = arith.constant 5 : index
    %c0_99 = arith.constant 0 : index
    %c0_100 = arith.constant 0 : index
    %165 = vector.load %arg6[%c2_97, %c5_98, %c0_99, %c0_100] : memref<4x9x8x128xf32, #tpu.memory_space<vmem>>, vector<1x1x8x128xf32>
    %166 = vector.shape_cast %165 : vector<1x1x8x128xf32> to vector<8x128xf32>
    %167 = vector.shape_cast %166 : vector<8x128xf32> to vector<1x8x128xf32>
    %168 = vector.shape_cast %167 : vector<1x8x128xf32> to vector<1x8x128xf32>
    %169 = vector.broadcast %168 : vector<1x8x128xf32> to vector<8x8x128xf32>
    %170 = arith.select %152, %169, %144 : vector<8x8x128xi1>, vector<8x8x128xf32>
    %c3_101 = arith.constant 3 : index
    %c5_102 = arith.constant 5 : index
    %c0_103 = arith.constant 0 : index
    %c0_104 = arith.constant 0 : index
    %171 = vector.load %arg6[%c3_101, %c5_102, %c0_103, %c0_104] : memref<4x9x8x128xf32, #tpu.memory_space<vmem>>, vector<1x1x8x128xf32>
    %172 = vector.shape_cast %171 : vector<1x1x8x128xf32> to vector<8x128xf32>
    %173 = vector.shape_cast %172 : vector<8x128xf32> to vector<1x8x128xf32>
    %174 = vector.shape_cast %173 : vector<1x8x128xf32> to vector<1x8x128xf32>
    %175 = vector.broadcast %174 : vector<1x8x128xf32> to vector<8x8x128xf32>
    %176 = arith.select %152, %175, %150 : vector<8x8x128xi1>, vector<8x8x128xf32>
    %cst_105 = arith.constant 6.000000e+00 : f32
    %177 = vector.broadcast %cst_105 : f32 to vector<8x8x128xf32>
    %178 = arith.cmpf oeq, %25, %177 : vector<8x8x128xf32>
    %c0_106 = arith.constant 0 : index
    %c6 = arith.constant 6 : index
    %c0_107 = arith.constant 0 : index
    %c0_108 = arith.constant 0 : index
    %179 = vector.load %arg6[%c0_106, %c6, %c0_107, %c0_108] : memref<4x9x8x128xf32, #tpu.memory_space<vmem>>, vector<1x1x8x128xf32>
    %180 = vector.shape_cast %179 : vector<1x1x8x128xf32> to vector<8x128xf32>
    %181 = vector.shape_cast %180 : vector<8x128xf32> to vector<1x8x128xf32>
    %182 = vector.shape_cast %181 : vector<1x8x128xf32> to vector<1x8x128xf32>
    %183 = vector.broadcast %182 : vector<1x8x128xf32> to vector<8x8x128xf32>
    %184 = arith.select %178, %183, %158 : vector<8x8x128xi1>, vector<8x8x128xf32>
    %c1_109 = arith.constant 1 : index
    %c6_110 = arith.constant 6 : index
    %c0_111 = arith.constant 0 : index
    %c0_112 = arith.constant 0 : index
    %185 = vector.load %arg6[%c1_109, %c6_110, %c0_111, %c0_112] : memref<4x9x8x128xf32, #tpu.memory_space<vmem>>, vector<1x1x8x128xf32>
    %186 = vector.shape_cast %185 : vector<1x1x8x128xf32> to vector<8x128xf32>
    %187 = vector.shape_cast %186 : vector<8x128xf32> to vector<1x8x128xf32>
    %188 = vector.shape_cast %187 : vector<1x8x128xf32> to vector<1x8x128xf32>
    %189 = vector.broadcast %188 : vector<1x8x128xf32> to vector<8x8x128xf32>
    %190 = arith.select %178, %189, %164 : vector<8x8x128xi1>, vector<8x8x128xf32>
    %c2_113 = arith.constant 2 : index
    %c6_114 = arith.constant 6 : index
    %c0_115 = arith.constant 0 : index
    %c0_116 = arith.constant 0 : index
    %191 = vector.load %arg6[%c2_113, %c6_114, %c0_115, %c0_116] : memref<4x9x8x128xf32, #tpu.memory_space<vmem>>, vector<1x1x8x128xf32>
    %192 = vector.shape_cast %191 : vector<1x1x8x128xf32> to vector<8x128xf32>
    %193 = vector.shape_cast %192 : vector<8x128xf32> to vector<1x8x128xf32>
    %194 = vector.shape_cast %193 : vector<1x8x128xf32> to vector<1x8x128xf32>
    %195 = vector.broadcast %194 : vector<1x8x128xf32> to vector<8x8x128xf32>
    %196 = arith.select %178, %195, %170 : vector<8x8x128xi1>, vector<8x8x128xf32>
    %c3_117 = arith.constant 3 : index
    %c6_118 = arith.constant 6 : index
    %c0_119 = arith.constant 0 : index
    %c0_120 = arith.constant 0 : index
    %197 = vector.load %arg6[%c3_117, %c6_118, %c0_119, %c0_120] : memref<4x9x8x128xf32, #tpu.memory_space<vmem>>, vector<1x1x8x128xf32>
    %198 = vector.shape_cast %197 : vector<1x1x8x128xf32> to vector<8x128xf32>
    %199 = vector.shape_cast %198 : vector<8x128xf32> to vector<1x8x128xf32>
    %200 = vector.shape_cast %199 : vector<1x8x128xf32> to vector<1x8x128xf32>
    %201 = vector.broadcast %200 : vector<1x8x128xf32> to vector<8x8x128xf32>
    %202 = arith.select %178, %201, %176 : vector<8x8x128xi1>, vector<8x8x128xf32>
    %cst_121 = arith.constant 7.000000e+00 : f32
    %203 = vector.broadcast %cst_121 : f32 to vector<8x8x128xf32>
    %204 = arith.cmpf oeq, %25, %203 : vector<8x8x128xf32>
    %c0_122 = arith.constant 0 : index
    %c7 = arith.constant 7 : index
    %c0_123 = arith.constant 0 : index
    %c0_124 = arith.constant 0 : index
    %205 = vector.load %arg6[%c0_122, %c7, %c0_123, %c0_124] : memref<4x9x8x128xf32, #tpu.memory_space<vmem>>, vector<1x1x8x128xf32>
    %206 = vector.shape_cast %205 : vector<1x1x8x128xf32> to vector<8x128xf32>
    %207 = vector.shape_cast %206 : vector<8x128xf32> to vector<1x8x128xf32>
    %208 = vector.shape_cast %207 : vector<1x8x128xf32> to vector<1x8x128xf32>
    %209 = vector.broadcast %208 : vector<1x8x128xf32> to vector<8x8x128xf32>
    %210 = arith.select %204, %209, %184 : vector<8x8x128xi1>, vector<8x8x128xf32>
    %c1_125 = arith.constant 1 : index
    %c7_126 = arith.constant 7 : index
    %c0_127 = arith.constant 0 : index
    %c0_128 = arith.constant 0 : index
    %211 = vector.load %arg6[%c1_125, %c7_126, %c0_127, %c0_128] : memref<4x9x8x128xf32, #tpu.memory_space<vmem>>, vector<1x1x8x128xf32>
    %212 = vector.shape_cast %211 : vector<1x1x8x128xf32> to vector<8x128xf32>
    %213 = vector.shape_cast %212 : vector<8x128xf32> to vector<1x8x128xf32>
    %214 = vector.shape_cast %213 : vector<1x8x128xf32> to vector<1x8x128xf32>
    %215 = vector.broadcast %214 : vector<1x8x128xf32> to vector<8x8x128xf32>
    %216 = arith.select %204, %215, %190 : vector<8x8x128xi1>, vector<8x8x128xf32>
    %c2_129 = arith.constant 2 : index
    %c7_130 = arith.constant 7 : index
    %c0_131 = arith.constant 0 : index
    %c0_132 = arith.constant 0 : index
    %217 = vector.load %arg6[%c2_129, %c7_130, %c0_131, %c0_132] : memref<4x9x8x128xf32, #tpu.memory_space<vmem>>, vector<1x1x8x128xf32>
    %218 = vector.shape_cast %217 : vector<1x1x8x128xf32> to vector<8x128xf32>
    %219 = vector.shape_cast %218 : vector<8x128xf32> to vector<1x8x128xf32>
    %220 = vector.shape_cast %219 : vector<1x8x128xf32> to vector<1x8x128xf32>
    %221 = vector.broadcast %220 : vector<1x8x128xf32> to vector<8x8x128xf32>
    %222 = arith.select %204, %221, %196 : vector<8x8x128xi1>, vector<8x8x128xf32>
    %c3_133 = arith.constant 3 : index
    %c7_134 = arith.constant 7 : index
    %c0_135 = arith.constant 0 : index
    %c0_136 = arith.constant 0 : index
    %223 = vector.load %arg6[%c3_133, %c7_134, %c0_135, %c0_136] : memref<4x9x8x128xf32, #tpu.memory_space<vmem>>, vector<1x1x8x128xf32>
    %224 = vector.shape_cast %223 : vector<1x1x8x128xf32> to vector<8x128xf32>
    %225 = vector.shape_cast %224 : vector<8x128xf32> to vector<1x8x128xf32>
    %226 = vector.shape_cast %225 : vector<1x8x128xf32> to vector<1x8x128xf32>
    %227 = vector.broadcast %226 : vector<1x8x128xf32> to vector<8x8x128xf32>
    %228 = arith.select %204, %227, %202 : vector<8x8x128xi1>, vector<8x8x128xf32>
    %cst_137 = arith.constant 8.000000e+00 : f32
    %229 = vector.broadcast %cst_137 : f32 to vector<8x8x128xf32>
    %230 = arith.cmpf oeq, %25, %229 : vector<8x8x128xf32>
    %c0_138 = arith.constant 0 : index
    %c8 = arith.constant 8 : index
    %c0_139 = arith.constant 0 : index
    %c0_140 = arith.constant 0 : index
    %231 = vector.load %arg6[%c0_138, %c8, %c0_139, %c0_140] : memref<4x9x8x128xf32, #tpu.memory_space<vmem>>, vector<1x1x8x128xf32>
    %232 = vector.shape_cast %231 : vector<1x1x8x128xf32> to vector<8x128xf32>
    %233 = vector.shape_cast %232 : vector<8x128xf32> to vector<1x8x128xf32>
    %234 = vector.shape_cast %233 : vector<1x8x128xf32> to vector<1x8x128xf32>
    %235 = vector.broadcast %234 : vector<1x8x128xf32> to vector<8x8x128xf32>
    %236 = arith.select %230, %235, %210 : vector<8x8x128xi1>, vector<8x8x128xf32>
    %c1_141 = arith.constant 1 : index
    %c8_142 = arith.constant 8 : index
    %c0_143 = arith.constant 0 : index
    %c0_144 = arith.constant 0 : index
    %237 = vector.load %arg6[%c1_141, %c8_142, %c0_143, %c0_144] : memref<4x9x8x128xf32, #tpu.memory_space<vmem>>, vector<1x1x8x128xf32>
    %238 = vector.shape_cast %237 : vector<1x1x8x128xf32> to vector<8x128xf32>
    %239 = vector.shape_cast %238 : vector<8x128xf32> to vector<1x8x128xf32>
    %240 = vector.shape_cast %239 : vector<1x8x128xf32> to vector<1x8x128xf32>
    %241 = vector.broadcast %240 : vector<1x8x128xf32> to vector<8x8x128xf32>
    %242 = arith.select %230, %241, %216 : vector<8x8x128xi1>, vector<8x8x128xf32>
    %c2_145 = arith.constant 2 : index
    %c8_146 = arith.constant 8 : index
    %c0_147 = arith.constant 0 : index
    %c0_148 = arith.constant 0 : index
    %243 = vector.load %arg6[%c2_145, %c8_146, %c0_147, %c0_148] : memref<4x9x8x128xf32, #tpu.memory_space<vmem>>, vector<1x1x8x128xf32>
    %244 = vector.shape_cast %243 : vector<1x1x8x128xf32> to vector<8x128xf32>
    %245 = vector.shape_cast %244 : vector<8x128xf32> to vector<1x8x128xf32>
    %246 = vector.shape_cast %245 : vector<1x8x128xf32> to vector<1x8x128xf32>
    %247 = vector.broadcast %246 : vector<1x8x128xf32> to vector<8x8x128xf32>
    %248 = arith.select %230, %247, %222 : vector<8x8x128xi1>, vector<8x8x128xf32>
    %c3_149 = arith.constant 3 : index
    %c8_150 = arith.constant 8 : index
    %c0_151 = arith.constant 0 : index
    %c0_152 = arith.constant 0 : index
    %249 = vector.load %arg6[%c3_149, %c8_150, %c0_151, %c0_152] : memref<4x9x8x128xf32, #tpu.memory_space<vmem>>, vector<1x1x8x128xf32>
    %250 = vector.shape_cast %249 : vector<1x1x8x128xf32> to vector<8x128xf32>
    %251 = vector.shape_cast %250 : vector<8x128xf32> to vector<1x8x128xf32>
    %252 = vector.shape_cast %251 : vector<1x8x128xf32> to vector<1x8x128xf32>
    %253 = vector.broadcast %252 : vector<1x8x128xf32> to vector<8x8x128xf32>
    %254 = arith.select %230, %253, %228 : vector<8x8x128xi1>, vector<8x8x128xf32>
    %255 = arith.mulf %26, %254 : vector<8x8x128xf32>
    %256 = arith.addf %248, %255 : vector<8x8x128xf32>
    %257 = arith.mulf %26, %256 : vector<8x8x128xf32>
    %258 = arith.addf %242, %257 : vector<8x8x128xf32>
    %259 = arith.mulf %26, %258 : vector<8x8x128xf32>
    %260 = arith.addf %236, %259 : vector<8x8x128xf32>
    %cst_153 = arith.constant dense<0.000000e+00> : vector<8x8xf32>
    %261 = vector.multi_reduction <add>, %260, %cst_153 [2] : vector<8x8x128xf32> to vector<8x8xf32>
    %262 = arith.index_cast %5 : i32 to index
    %c0_154 = arith.constant 0 : index
    %263 = vector.load %arg7[%262, %c0_154] : memref<8x8xf32, #tpu.memory_space<vmem>>, vector<8x8xf32>
    %264 = arith.addf %263, %261 : vector<8x8xf32>
    %265 = arith.index_cast %5 : i32 to index
    %c0_155 = arith.constant 0 : index
    %266 = vector.load %arg7[%265, %c0_155] : memref<8x8xf32, #tpu.memory_space<vmem>>, vector<8x8xf32>
    tpu.vector_store %arg7[%265, %c0_155], %264 {strides = array<i32>} : memref<8x8xf32, #tpu.memory_space<vmem>>, vector<8x8xf32>,
    %c1_i32 = arith.constant 1 : i32
    return
  }
  func.func @transform_0(%arg0: i32, %arg1: i32, %arg2: i32) -> (i32, i32) {
    %c0_i32 = arith.constant 0 : i32
    return %arg1, %arg2 : i32, i32
  }
  func.func @transform_1(%arg0: i32, %arg1: i32, %arg2: i32) -> (i32, i32) {
    %c0_i32 = arith.constant 0 : i32
    return %arg0, %arg2 : i32, i32
  }
  func.func @transform_2(%arg0: i32, %arg1: i32, %arg2: i32) -> (i32, i32) {
    %c0_i32 = arith.constant 0 : i32
    %c0_i32_0 = arith.constant 0 : i32
    return %c0_i32, %arg0 : i32, i32
  }
  func.func @transform_3(%arg0: i32, %arg1: i32, %arg2: i32) -> (i32, i32, i32, i32) {
    %c0_i32 = arith.constant 0 : i32
    %c0_i32_0 = arith.constant 0 : i32
    %c0_i32_1 = arith.constant 0 : i32
    return %c0_i32, %c0_i32_0, %arg0, %arg2 : i32, i32, i32, i32
  }
  func.func @transform_4(%arg0: i32, %arg1: i32, %arg2: i32) -> (i32, i32) {
    %c0_i32 = arith.constant 0 : i32
    return %arg1, %arg0 : i32, i32
  }
}

</mosaic_0001>

<llo_original>
// kernel: tpu_custom_call.1
$region0: #{tpu_custom_call.1}
  #allocation0 [shape = 'u32[]', space=smem, size = 0x4, offset = 0x4, fixed_abs, tag = 'smem constant byte address 0x4 - core index']
  #allocation1 [shape = 'u32[144,128]{1,0:T(1,128)}', space=vmem, size = 0x12000, scoped, tag = 'internal scratch']
  %s0 = inlined_call_operand.hbm [shape: f32[8,128], index: 0, kind: input, shape index: {}]
  %s1 = inlined_call_operand.hbm [shape: f32[8,128], index: 1, kind: input, shape index: {}]
  %s2 = inlined_call_operand.vmem [shape: f32[1,8], index: 2, kind: input, shape index: {}]
  %s3 = inlined_call_operand.hbm [shape: f32[4,9,8,128], index: 3, kind: input, shape index: {}]
  %s4 = inlined_call_operand.hbm [shape: f32[8,8], index: 4, kind: output, shape index: {}]
  %s5 = sld [smem:[#allocation0]]
  $region42: #{tpu_custom_call.1} parent=0
    _
  %s7 = ssub.s32 1, %s5
  %s8 = scalar_select 0, %s7, %s5
  $region1: #{tpu_custom_call.1} parent=0
    #allocation2 [shape = 'u8[4096]{0}', space=vmem, size = 0x1000, scoped, tag = 'input window, operand 0, single buffered']
    #allocation3 [shape = 's32[1]{0}', space=sflag, size = 0x4, scoped, tag = 'scoped memory for tpu_custom_call.1']
    #allocation4 [shape = 's32[1]{0}', space=sflag, size = 0x4, scoped, tag = 'scoped memory for tpu_custom_call.1']
    #allocation5 [shape = 'u8[4096]{0}', space=vmem, size = 0x1000, scoped, tag = 'input window, operand 1, single buffered']
    #allocation6 [shape = 's32[1]{0}', space=sflag, size = 0x4, scoped, tag = 'scoped memory for tpu_custom_call.1']
    #allocation7 [shape = 'u8[147456]{0}', space=vmem, size = 0x24000, scoped, tag = 'input window, operand 3, single buffered']
    #allocation8 [shape = 'u8[4096]{0}', space=vmem, size = 0x1000, scoped, tag = 'output window, operand 0, single buffered']
    %9 = vsyncpa [#allocation3], 0
    %10 = vsyncpa [#allocation6], 0
    %11 = vsyncpa [#allocation4], 0
    // Predicated region
    $region2: #{tpu_custom_call.1} parent=1 // pred_check
      _
    $region3: #{tpu_custom_call.1} parent=1 // pred_check_branch
      %13 = sbr.rel (0) target = $region5
    $region4: #{tpu_custom_call.1} parent=1 // pred_region
      %s15 = ssub.s32 128, 128
      %16 = vsyncadd [#allocation3], %s15
      %s18 = sshll.u32 [#allocation2], 4
      %s19 = int_to_ptr.vmem [resolvable:$true] %s18
      %21 = dma.hbm_to_vmem [thread:$0]  %s0, 128, %s19, [#allocation3]
    $region5: #{tpu_custom_call.1} parent=1 // pred_fallthru
      _
    // Predicated region
    $region6: #{tpu_custom_call.1} parent=1 // pred_check
      _
    $region7: #{tpu_custom_call.1} parent=1 // pred_check_branch
      %23 = sbr.rel (0) target = $region9
    $region8: #{tpu_custom_call.1} parent=1 // pred_region
      %s25 = ssub.s32 128, 128
      %26 = vsyncadd [#allocation6], %s25
      %s28 = sshll.u32 [#allocation5], 4
      %s29 = int_to_ptr.vmem [resolvable:$true] %s28
      %31 = dma.hbm_to_vmem [thread:$0]  %s1, 128, %s29, [#allocation6]
    $region9: #{tpu_custom_call.1} parent=1 // pred_fallthru
      _
    // Predicated region
    $region10: #{tpu_custom_call.1} parent=1 // pred_check
      _
    $region11: #{tpu_custom_call.1} parent=1 // pred_check_branch
      %33 = sbr.rel (0) target = $region13
    $region12: #{tpu_custom_call.1} parent=1 // pred_region
      _
    $region13: #{tpu_custom_call.1} parent=1 // pred_fallthru
      _
    // Predicated region
    $region14: #{tpu_custom_call.1} parent=1 // pred_check
      _
    $region15: #{tpu_custom_call.1} parent=1 // pred_check_branch
      %35 = sbr.rel (0) target = $region17
    $region16: #{tpu_custom_call.1} parent=1 // pred_region
      %s37 = ssub.s32 4608, 4608
      %38 = vsyncadd [#allocation6], %s37
      %s39 = sshll.u32 [#allocation7], 4
      %s40 = int_to_ptr.vmem [resolvable:$true] %s39
      %45 = dma.hbm_to_vmem [thread:$0]  %s3, 4608, %s40, [#allocation6], 128, 128, 8
    $region17: #{tpu_custom_call.1} parent=1 // pred_fallthru
      _
    // Predicated region
    $region18: #{tpu_custom_call.1} parent=1 // pred_check
      _
    $region19: #{tpu_custom_call.1} parent=1 // pred_check_branch
      %47 = sbr.rel (0) target = $region21
    $region20: #{tpu_custom_call.1} parent=1 // pred_region
      %48 = dma.done [#allocation3], 128
    $region21: #{tpu_custom_call.1} parent=1 // pred_fallthru
      _
    // Predicated region
    $region22: #{tpu_custom_call.1} parent=1 // pred_check
      _
    $region23: #{tpu_custom_call.1} parent=1 // pred_check_branch
      %50 = sbr.rel (0) target = $region25
    $region24: #{tpu_custom_call.1} parent=1 // pred_region
      %51 = dma.done [#allocation6], 128
    $region25: #{tpu_custom_call.1} parent=1 // pred_fallthru
      _
    // Predicated region
    $region26: #{tpu_custom_call.1} parent=1 // pred_check
      _
    $region27: #{tpu_custom_call.1} parent=1 // pred_check_branch
      %53 = sbr.rel (0) target = $region29
    $region28: #{tpu_custom_call.1} parent=1 // pred_region
      %54 = dma.done [#allocation6], 4608
    $region29: #{tpu_custom_call.1} parent=1 // pred_fallthru
      _
    %p55 = scmp.eq.s32.totalorder 0, 0
    // Predicated region
    $region30: #{tpu_custom_call.1} parent=1 // pred_check
      %p56 = pneg %p55
    $region31: #{tpu_custom_call.1} parent=1 // pred_check_branch
      %58 = sbr.rel (%p56) target = $region33
    $region32: #{tpu_custom_call.1} parent=1 // pred_region
      %v59 = vld [vmem:[%s2] sm:$0x1]
      %v61 = vlaneseq
      %v62 = vshrl.u32 %v61, 7
      %v63 = vsub.s32 0, %v62
      %v64 = vrot.slane %v59, %v63
      %vm66 = vcmask 64512
      %67 = vst.msk [vmem:[#allocation8] sm:$0xff] %vm66, %v64
    $region33: #{tpu_custom_call.1} parent=1 // pred_fallthru
      _
    %v68 = vld [vmem:[#allocation5] sm:$0xff]
    %v69 = vld [vmem:[#allocation2] sm:$0xff]
    %v71 = vcombine.high %v69, %v69
    %v73 = vunpack.c.l.s4 1966171168
    %v74 = vunpack.c.0.s8 %v73
    %v75 = vlaneseq
    %v76 = vshrl.u32 %v75, 7
    %v77 = vsub.s32 %v74, %v76
    %v78 = vrot.slane %v69, %v77
    %v80 = vunpack.c.l.s4 1966171168
    %v81 = vunpack.c.0.s8 %v80
    %v82 = vlaneseq
    %v83 = vshrl.u32 %v82, 7
    %v84 = vsub.s32 %v81, %v83
    %v85 = vrot.slane %v71, %v84
    %v86 = vcombine.high %v78, %v78
    %v87 = vcombine.high %v85, %v85
    %v89 = vunpack.c.l.s4 1966171168
    %v90 = vunpack.c.0.s8 %v89
    %v91 = vlaneseq
    %v92 = vshrl.u32 %v91, 7
    %v93 = vsub.s32 %v90, %v92
    %v94 = vrot.slane %v78, %v93
    %v96 = vunpack.c.l.s4 1966171168
    %v97 = vunpack.c.0.s8 %v96
    %v98 = vlaneseq
    %v99 = vshrl.u32 %v98, 7
    %v100 = vsub.s32 %v97, %v99
    %v101 = vrot.slane %v85, %v100
    %v103 = vunpack.c.l.s4 1966171168
    %v104 = vunpack.c.0.s8 %v103
    %v105 = vlaneseq
    %v106 = vshrl.u32 %v105, 7
    %v107 = vsub.s32 %v104, %v106
    %v108 = vrot.slane %v86, %v107
    %v110 = vunpack.c.l.s4 1966171168
    %v111 = vunpack.c.0.s8 %v110
    %v112 = vlaneseq
    %v113 = vshrl.u32 %v112, 7
    %v114 = vsub.s32 %v111, %v113
    %v115 = vrot.slane %v87, %v114
    %v116 = vcombine.high %v94, %v94
    %v117 = vcombine.high %v101, %v101
    %v118 = vcombine.high %v108, %v108
    %v119 = vcombine.high %v115, %v115
    %v120 = vlaneseq
    %v121 = vshrl.u32 %v120, 7
    %v122 = vsub.s32 0, %v121
    %v123 = vrot.slane %v94, %v122
    %v124 = vlaneseq
    %v125 = vshrl.u32 %v124, 7
    %v126 = vsub.s32 0, %v125
    %v127 = vrot.slane %v108, %v126
    %v128 = vlaneseq
    %v129 = vshrl.u32 %v128, 7
    %v130 = vsub.s32 0, %v129
    %v131 = vrot.slane %v116, %v130
    %v132 = vlaneseq
    %v133 = vshrl.u32 %v132, 7
    %v134 = vsub.s32 0, %v133
    %v135 = vrot.slane %v118, %v134
    %v136 = vlaneseq
    %v137 = vshrl.u32 %v136, 7
    %v138 = vsub.s32 0, %v137
    %v139 = vrot.slane %v101, %v138
    %v140 = vlaneseq
    %v141 = vshrl.u32 %v140, 7
    %v142 = vsub.s32 0, %v141
    %v143 = vrot.slane %v115, %v142
    %v144 = vlaneseq
    %v145 = vshrl.u32 %v144, 7
    %v146 = vsub.s32 0, %v145
    %v147 = vrot.slane %v117, %v146
    %v148 = vlaneseq
    %v149 = vshrl.u32 %v148, 7
    %v150 = vsub.s32 0, %v149
    %v151 = vrot.slane %v119, %v150
    %v160 = vmul.f32 %v123, %v68
    %v161 = vmul.f32 %v127, %v68
    %v162 = vmul.f32 %v131, %v68
    %v163 = vmul.f32 %v135, %v68
    %v164 = vmul.f32 %v139, %v68
    %v165 = vmul.f32 %v143, %v68
    %v166 = vmul.f32 %v147, %v68
    %v167 = vmul.f32 %v151, %v68
    %v168 = vmax.f32 %v160, -1.0
    %v169 = vmax.f32 %v161, -1.0
    %v170 = vmax.f32 %v162, -1.0
    %v171 = vmax.f32 %v163, -1.0
    %v172 = vmax.f32 %v164, -1.0
    %v173 = vmax.f32 %v165, -1.0
    %v174 = vmax.f32 %v166, -1.0
    %v175 = vmax.f32 %v167, -1.0
    %v176 = vmin.f32 %v168, 1.0
    %v177 = vmin.f32 %v169, 1.0
    %v178 = vmin.f32 %v170, 1.0
    %v179 = vmin.f32 %v171, 1.0
    %v180 = vmin.f32 %v172, 1.0
    %v181 = vmin.f32 %v173, 1.0
    %v182 = vmin.f32 %v174, 1.0
    %v183 = vmin.f32 %v175, 1.0
    %v184 = vsub.f32 %v176, -1.0
    %v185 = vsub.f32 %v177, -1.0
    %v186 = vsub.f32 %v178, -1.0
    %v187 = vsub.f32 %v179, -1.0
    %v188 = vsub.f32 %v180, -1.0
    %v189 = vsub.f32 %v181, -1.0
    %v190 = vsub.f32 %v182, -1.0
    %v191 = vsub.f32 %v183, -1.0
    %v192 = vmul.f32 %v184, 4.5
    %v193 = vmul.f32 %v185, 4.5
    %v194 = vmul.f32 %v186, 4.5
    %v195 = vmul.f32 %v187, 4.5
    %v196 = vmul.f32 %v188, 4.5
    %v197 = vmul.f32 %v189, 4.5
    %v198 = vmul.f32 %v190, 4.5
    %v199 = vmul.f32 %v191, 4.5
    %v200 = vfloor.f32 %v192
    %v201 = vfloor.f32 %v193
    %v202 = vfloor.f32 %v194
    %v203 = vfloor.f32 %v195
    %v204 = vfloor.f32 %v196
    %v205 = vfloor.f32 %v197
    %v206 = vfloor.f32 %v198
    %v207 = vfloor.f32 %v199
    %v208 = vmax.f32 %v200, 0.0
    %v209 = vmax.f32 %v201, 0.0
    %v210 = vmax.f32 %v202, 0.0
    %v211 = vmax.f32 %v203, 0.0
    %v212 = vmax.f32 %v204, 0.0
    %v213 = vmax.f32 %v205, 0.0
    %v214 = vmax.f32 %v206, 0.0
    %v215 = vmax.f32 %v207, 0.0
    %v216 = vmin.f32 %v208, 8.0
    %v217 = vmin.f32 %v209, 8.0
    %v218 = vmin.f32 %v210, 8.0
    %v219 = vmin.f32 %v211, 8.0
    %v220 = vmin.f32 %v212, 8.0
    %v221 = vmin.f32 %v213, 8.0
    %v222 = vmin.f32 %v214, 8.0
    %v223 = vmin.f32 %v215, 8.0
    %v224 = vsub.f32 %v192, %v216
    %v225 = vsub.f32 %v193, %v217
    %v226 = vsub.f32 %v194, %v218
    %v227 = vsub.f32 %v195, %v219
    %v228 = vsub.f32 %v196, %v220
    %v229 = vsub.f32 %v197, %v221
    %v230 = vsub.f32 %v198, %v222
    %v231 = vsub.f32 %v199, %v223
    %v232 = vld [vmem:[#allocation7] sm:$0xff]
    %s233 = scalar_lea.vmem [#allocation7], 72
    %v234 = vld [vmem:[%s233] sm:$0xff]
    %s235 = scalar_lea.vmem [#allocation7], 144
    %v236 = vld [vmem:[%s235] sm:$0xff]
    %s237 = scalar_lea.vmem [#allocation7], 216
    %v238 = vld [vmem:[%s237] sm:$0xff]
    %vm239 = vcmp.eq.f32.partialorder %v216, 1.0
    %vm240 = vcmp.eq.f32.partialorder %v217, 1.0
    %vm241 = vcmp.eq.f32.partialorder %v218, 1.0
    %vm242 = vcmp.eq.f32.partialorder %v219, 1.0
    %vm243 = vcmp.eq.f32.partialorder %v220, 1.0
    %vm244 = vcmp.eq.f32.partialorder %v221, 1.0
    %vm245 = vcmp.eq.f32.partialorder %v222, 1.0
    %vm246 = vcmp.eq.f32.partialorder %v223, 1.0
    %s247 = scalar_lea.vmem [#allocation7], 8
    %v248 = vld [vmem:[%s247] sm:$0xff]
    %v249 = vsel %vm239, %v248, %v232
    %v250 = vsel %vm240, %v248, %v232
    %v251 = vsel %vm241, %v248, %v232
    %v252 = vsel %vm242, %v248, %v232
    %v253 = vsel %vm243, %v248, %v232
    %v254 = vsel %vm244, %v248, %v232
    %v255 = vsel %vm245, %v248, %v232
    %v256 = vsel %vm246, %v248, %v232
    %s257 = scalar_lea.vmem [#allocation7], 80
    %v258 = vld [vmem:[%s257] sm:$0xff]
    %v259 = vsel %vm239, %v258, %v234
    %v260 = vsel %vm240, %v258, %v234
    %v261 = vsel %vm241, %v258, %v234
    %v262 = vsel %vm242, %v258, %v234
    %v263 = vsel %vm243, %v258, %v234
    %v264 = vsel %vm244, %v258, %v234
    %v265 = vsel %vm245, %v258, %v234
    %v266 = vsel %vm246, %v258, %v234
    %s267 = scalar_lea.vmem [#allocation7], 152
    %v268 = vld [vmem:[%s267] sm:$0xff]
    %v269 = vsel %vm239, %v268, %v236
    %v270 = vsel %vm240, %v268, %v236
    %v271 = vsel %vm241, %v268, %v236
    %v272 = vsel %vm242, %v268, %v236
    %v273 = vsel %vm243, %v268, %v236
    %v274 = vsel %vm244, %v268, %v236
    %v275 = vsel %vm245, %v268, %v236
    %v276 = vsel %vm246, %v268, %v236
    %s277 = scalar_lea.vmem [#allocation7], 224
    %v278 = vld [vmem:[%s277] sm:$0xff]
    %v279 = vsel %vm239, %v278, %v238
    %v280 = vsel %vm240, %v278, %v238
    %v281 = vsel %vm241, %v278, %v238
    %v282 = vsel %vm242, %v278, %v238
    %v283 = vsel %vm243, %v278, %v238
    %v284 = vsel %vm244, %v278, %v238
    %v285 = vsel %vm245, %v278, %v238
    %v286 = vsel %vm246, %v278, %v238
    %vm287 = vcmp.eq.f32.partialorder %v216, 2.0
    %vm288 = vcmp.eq.f32.partialorder %v217, 2.0
    %vm289 = vcmp.eq.f32.partialorder %v218, 2.0
    %vm290 = vcmp.eq.f32.partialorder %v219, 2.0
    %vm291 = vcmp.eq.f32.partialorder %v220, 2.0
    %vm292 = vcmp.eq.f32.partialorder %v221, 2.0
    %vm293 = vcmp.eq.f32.partialorder %v222, 2.0
    %vm294 = vcmp.eq.f32.partialorder %v223, 2.0
    %s295 = scalar_lea.vmem [#allocation7], 16
    %v296 = vld [vmem:[%s295] sm:$0xff]
    %v297 = vsel %vm287, %v296, %v249
    %v298 = vsel %vm288, %v296, %v250
    %v299 = vsel %vm289, %v296, %v251
    %v300 = vsel %vm290, %v296, %v252
    %v301 = vsel %vm291, %v296, %v253
    %v302 = vsel %vm292, %v296, %v254
    %v303 = vsel %vm293, %v296, %v255
    %v304 = vsel %vm294, %v296, %v256
    %s305 = scalar_lea.vmem [#allocation7], 88
    %v306 = vld [vmem:[%s305] sm:$0xff]
    %v307 = vsel %vm287, %v306, %v259
    %v308 = vsel %vm288, %v306, %v260
    %v309 = vsel %vm289, %v306, %v261
    %v310 = vsel %vm290, %v306, %v262
    %v311 = vsel %vm291, %v306, %v263
    %v312 = vsel %vm292, %v306, %v264
    %v313 = vsel %vm293, %v306, %v265
    %v314 = vsel %vm294, %v306, %v266
    %s315 = scalar_lea.vmem [#allocation7], 160
    %v316 = vld [vmem:[%s315] sm:$0xff]
    %v317 = vsel %vm287, %v316, %v269
    %v318 = vsel %vm288, %v316, %v270
    %v319 = vsel %vm289, %v316, %v271
    %v320 = vsel %vm290, %v316, %v272
    %v321 = vsel %vm291, %v316, %v273
    %v322 = vsel %vm292, %v316, %v274
    %v323 = vsel %vm293, %v316, %v275
    %v324 = vsel %vm294, %v316, %v276
    %s325 = scalar_lea.vmem [#allocation7], 232
    %v326 = vld [vmem:[%s325] sm:$0xff]
    %v327 = vsel %vm287, %v326, %v279
    %v328 = vsel %vm288, %v326, %v280
    %v329 = vsel %vm289, %v326, %v281
    %v330 = vsel %vm290, %v326, %v282
    %v331 = vsel %vm291, %v326, %v283
    %v332 = vsel %vm292, %v326, %v284
    %v333 = vsel %vm293, %v326, %v285
    %v334 = vsel %vm294, %v326, %v286
    %vm335 = vcmp.eq.f32.partialorder %v216, 3.0
    %vm336 = vcmp.eq.f32.partialorder %v217, 3.0
    %vm337 = vcmp.eq.f32.partialorder %v218, 3.0
    %vm338 = vcmp.eq.f32.partialorder %v219, 3.0
    %vm339 = vcmp.eq.f32.partialorder %v220, 3.0
    %vm340 = vcmp.eq.f32.partialorder %v221, 3.0
    %vm341 = vcmp.eq.f32.partialorder %v222, 3.0
    %vm342 = vcmp.eq.f32.partialorder %v223, 3.0
    %s343 = scalar_lea.vmem [#allocation7], 24
    %v344 = vld [vmem:[%s343] sm:$0xff]
    %v345 = vsel %vm335, %v344, %v297
    %v346 = vsel %vm336, %v344, %v298
    %v347 = vsel %vm337, %v344, %v299
    %v348 = vsel %vm338, %v344, %v300
    %v349 = vsel %vm339, %v344, %v301
    %v350 = vsel %vm340, %v344, %v302
    %v351 = vsel %vm341, %v344, %v303
    %v352 = vsel %vm342, %v344, %v304
    %s353 = scalar_lea.vmem [#allocation7], 96
    %v354 = vld [vmem:[%s353] sm:$0xff]
    %v355 = vsel %vm335, %v354, %v307
    %v356 = vsel %vm336, %v354, %v308
    %v357 = vsel %vm337, %v354, %v309
    %v358 = vsel %vm338, %v354, %v310
    %v359 = vsel %vm339, %v354, %v311
    %v360 = vsel %vm340, %v354, %v312
    %v361 = vsel %vm341, %v354, %v313
    %v362 = vsel %vm342, %v354, %v314
    %s363 = scalar_lea.vmem [#allocation7], 168
    %v364 = vld [vmem:[%s363] sm:$0xff]
    %v365 = vsel %vm335, %v364, %v317
    %v366 = vsel %vm336, %v364, %v318
    %v367 = vsel %vm337, %v364, %v319
    %v368 = vsel %vm338, %v364, %v320
    %v369 = vsel %vm339, %v364, %v321
    %v370 = vsel %vm340, %v364, %v322
    %v371 = vsel %vm341, %v364, %v323
    %v372 = vsel %vm342, %v364, %v324
    %s373 = scalar_lea.vmem [#allocation7], 240
    %v374 = vld [vmem:[%s373] sm:$0xff]
    %v375 = vsel %vm335, %v374, %v327
    %v376 = vsel %vm336, %v374, %v328
    %v377 = vsel %vm337, %v374, %v329
    %v378 = vsel %vm338, %v374, %v330
    %v379 = vsel %vm339, %v374, %v331
    %v380 = vsel %vm340, %v374, %v332
    %v381 = vsel %vm341, %v374, %v333
    %v382 = vsel %vm342, %v374, %v334
    %vm383 = vcmp.eq.f32.partialorder %v216, 4.0
    %vm384 = vcmp.eq.f32.partialorder %v217, 4.0
    %vm385 = vcmp.eq.f32.partialorder %v218, 4.0
    %vm386 = vcmp.eq.f32.partialorder %v219, 4.0
    %vm387 = vcmp.eq.f32.partialorder %v220, 4.0
    %vm388 = vcmp.eq.f32.partialorder %v221, 4.0
    %vm389 = vcmp.eq.f32.partialorder %v222, 4.0
    %vm390 = vcmp.eq.f32.partialorder %v223, 4.0
    %s391 = scalar_lea.vmem [#allocation7], 32
    %v392 = vld [vmem:[%s391] sm:$0xff]
    %v393 = vsel %vm383, %v392, %v345
    %v394 = vsel %vm384, %v392, %v346
    %v395 = vsel %vm385, %v392, %v347
    %v396 = vsel %vm386, %v392, %v348
    %v397 = vsel %vm387, %v392, %v349
    %v398 = vsel %vm388, %v392, %v350
    %v399 = vsel %vm389, %v392, %v351
    %v400 = vsel %vm390, %v392, %v352
    %s401 = scalar_lea.vmem [#allocation7], 104
    %v402 = vld [vmem:[%s401] sm:$0xff]
    %v403 = vsel %vm383, %v402, %v355
    %v404 = vsel %vm384, %v402, %v356
    %v405 = vsel %vm385, %v402, %v357
    %v406 = vsel %vm386, %v402, %v358
    %v407 = vsel %vm387, %v402, %v359
    %v408 = vsel %vm388, %v402, %v360
    %v409 = vsel %vm389, %v402, %v361
    %v410 = vsel %vm390, %v402, %v362
    %s411 = scalar_lea.vmem [#allocation7], 176
    %v412 = vld [vmem:[%s411] sm:$0xff]
    %v413 = vsel %vm383, %v412, %v365
    %v414 = vsel %vm384, %v412, %v366
    %v415 = vsel %vm385, %v412, %v367
    %v416 = vsel %vm386, %v412, %v368
    %v417 = vsel %vm387, %v412, %v369
    %v418 = vsel %vm388, %v412, %v370
    %v419 = vsel %vm389, %v412, %v371
    %v420 = vsel %vm390, %v412, %v372
    %s421 = scalar_lea.vmem [#allocation7], 248
    %v422 = vld [vmem:[%s421] sm:$0xff]
    %v423 = vsel %vm383, %v422, %v375
    %v424 = vsel %vm384, %v422, %v376
    %v425 = vsel %vm385, %v422, %v377
    %v426 = vsel %vm386, %v422, %v378
    %v427 = vsel %vm387, %v422, %v379
    %v428 = vsel %vm388, %v422, %v380
    %v429 = vsel %vm389, %v422, %v381
    %v430 = vsel %vm390, %v422, %v382
    %vm431 = vcmp.eq.f32.partialorder %v216, 5.0
    %vm432 = vcmp.eq.f32.partialorder %v217, 5.0
    %vm433 = vcmp.eq.f32.partialorder %v218, 5.0
    %vm434 = vcmp.eq.f32.partialorder %v219, 5.0
    %vm435 = vcmp.eq.f32.partialorder %v220, 5.0
    %vm436 = vcmp.eq.f32.partialorder %v221, 5.0
    %vm437 = vcmp.eq.f32.partialorder %v222, 5.0
    %vm438 = vcmp.eq.f32.partialorder %v223, 5.0
    %s439 = scalar_lea.vmem [#allocation7], 40
    %v440 = vld [vmem:[%s439] sm:$0xff]
    %v441 = vsel %vm431, %v440, %v393
    %v442 = vsel %vm432, %v440, %v394
    %v443 = vsel %vm433, %v440, %v395
    %v444 = vsel %vm434, %v440, %v396
    %v445 = vsel %vm435, %v440, %v397
    %v446 = vsel %vm436, %v440, %v398
    %v447 = vsel %vm437, %v440, %v399
    %v448 = vsel %vm438, %v440, %v400
    %s449 = scalar_lea.vmem [#allocation7], 112
    %v450 = vld [vmem:[%s449] sm:$0xff]
    %v451 = vsel %vm431, %v450, %v403
    %v452 = vsel %vm432, %v450, %v404
    %v453 = vsel %vm433, %v450, %v405
    %v454 = vsel %vm434, %v450, %v406
    %v455 = vsel %vm435, %v450, %v407
    %v456 = vsel %vm436, %v450, %v408
    %v457 = vsel %vm437, %v450, %v409
    %v458 = vsel %vm438, %v450, %v410
    %s459 = scalar_lea.vmem [#allocation7], 184
    %v460 = vld [vmem:[%s459] sm:$0xff]
    %v461 = vsel %vm431, %v460, %v413
    %v462 = vsel %vm432, %v460, %v414
    %v463 = vsel %vm433, %v460, %v415
    %v464 = vsel %vm434, %v460, %v416
    %v465 = vsel %vm435, %v460, %v417
    %v466 = vsel %vm436, %v460, %v418
    %v467 = vsel %vm437, %v460, %v419
    %v468 = vsel %vm438, %v460, %v420
    %s469 = scalar_lea.vmem [#allocation7], 256
    %v470 = vld [vmem:[%s469] sm:$0xff]
    %v471 = vsel %vm431, %v470, %v423
    %v472 = vsel %vm432, %v470, %v424
    %v473 = vsel %vm433, %v470, %v425
    %v474 = vsel %vm434, %v470, %v426
    %v475 = vsel %vm435, %v470, %v427
    %v476 = vsel %vm436, %v470, %v428
    %v477 = vsel %vm437, %v470, %v429
    %v478 = vsel %vm438, %v470, %v430
    %vm479 = vcmp.eq.f32.partialorder %v216, 6.0
    %vm480 = vcmp.eq.f32.partialorder %v217, 6.0
    %vm481 = vcmp.eq.f32.partialorder %v218, 6.0
    %vm482 = vcmp.eq.f32.partialorder %v219, 6.0
    %vm483 = vcmp.eq.f32.partialorder %v220, 6.0
    %vm484 = vcmp.eq.f32.partialorder %v221, 6.0
    %vm485 = vcmp.eq.f32.partialorder %v222, 6.0
    %vm486 = vcmp.eq.f32.partialorder %v223, 6.0
    %s487 = scalar_lea.vmem [#allocation7], 48
    %v488 = vld [vmem:[%s487] sm:$0xff]
    %v489 = vsel %vm479, %v488, %v441
    %v490 = vsel %vm480, %v488, %v442
    %v491 = vsel %vm481, %v488, %v443
    %v492 = vsel %vm482, %v488, %v444
    %v493 = vsel %vm483, %v488, %v445
    %v494 = vsel %vm484, %v488, %v446
    %v495 = vsel %vm485, %v488, %v447
    %v496 = vsel %vm486, %v488, %v448
    %s497 = scalar_lea.vmem [#allocation7], 120
    %v498 = vld [vmem:[%s497] sm:$0xff]
    %v499 = vsel %vm479, %v498, %v451
    %v500 = vsel %vm480, %v498, %v452
    %v501 = vsel %vm481, %v498, %v453
    %v502 = vsel %vm482, %v498, %v454
    %v503 = vsel %vm483, %v498, %v455
    %v504 = vsel %vm484, %v498, %v456
    %v505 = vsel %vm485, %v498, %v457
    %v506 = vsel %vm486, %v498, %v458
    %s507 = scalar_lea.vmem [#allocation7], 192
    %v508 = vld [vmem:[%s507] sm:$0xff]
    %v509 = vsel %vm479, %v508, %v461
    %v510 = vsel %vm480, %v508, %v462
    %v511 = vsel %vm481, %v508, %v463
    %v512 = vsel %vm482, %v508, %v464
    %v513 = vsel %vm483, %v508, %v465
    %v514 = vsel %vm484, %v508, %v466
    %v515 = vsel %vm485, %v508, %v467
    %v516 = vsel %vm486, %v508, %v468
    %s517 = scalar_lea.vmem [#allocation7], 264
    %v518 = vld [vmem:[%s517] sm:$0xff]
    %v519 = vsel %vm479, %v518, %v471
    %v520 = vsel %vm480, %v518, %v472
    %v521 = vsel %vm481, %v518, %v473
    %v522 = vsel %vm482, %v518, %v474
    %v523 = vsel %vm483, %v518, %v475
    %v524 = vsel %vm484, %v518, %v476
    %v525 = vsel %vm485, %v518, %v477
    %v526 = vsel %vm486, %v518, %v478
    %vm527 = vcmp.eq.f32.partialorder %v216, 7.0
    %vm528 = vcmp.eq.f32.partialorder %v217, 7.0
    %vm529 = vcmp.eq.f32.partialorder %v218, 7.0
    %vm530 = vcmp.eq.f32.partialorder %v219, 7.0
    %vm531 = vcmp.eq.f32.partialorder %v220, 7.0
    %vm532 = vcmp.eq.f32.partialorder %v221, 7.0
    %vm533 = vcmp.eq.f32.partialorder %v222, 7.0
    %vm534 = vcmp.eq.f32.partialorder %v223, 7.0
    %s535 = scalar_lea.vmem [#allocation7], 56
    %v536 = vld [vmem:[%s535] sm:$0xff]
    %v537 = vsel %vm527, %v536, %v489
    %v538 = vsel %vm528, %v536, %v490
    %v539 = vsel %vm529, %v536, %v491
    %v540 = vsel %vm530, %v536, %v492
    %v541 = vsel %vm531, %v536, %v493
    %v542 = vsel %vm532, %v536, %v494
    %v543 = vsel %vm533, %v536, %v495
    %v544 = vsel %vm534, %v536, %v496
    %s545 = scalar_lea.vmem [#allocation7], 128
    %v546 = vld [vmem:[%s545] sm:$0xff]
    %v547 = vsel %vm527, %v546, %v499
    %v548 = vsel %vm528, %v546, %v500
    %v549 = vsel %vm529, %v546, %v501
    %v550 = vsel %vm530, %v546, %v502
    %v551 = vsel %vm531, %v546, %v503
    %v552 = vsel %vm532, %v546, %v504
    %v553 = vsel %vm533, %v546, %v505
    %v554 = vsel %vm534, %v546, %v506
    %s555 = scalar_lea.vmem [#allocation7], 200
    %v556 = vld [vmem:[%s555] sm:$0xff]
    %v557 = vsel %vm527, %v556, %v509
    %v558 = vsel %vm528, %v556, %v510
    %v559 = vsel %vm529, %v556, %v511
    %v560 = vsel %vm530, %v556, %v512
    %v561 = vsel %vm531, %v556, %v513
    %v562 = vsel %vm532, %v556, %v514
    %v563 = vsel %vm533, %v556, %v515
    %v564 = vsel %vm534, %v556, %v516
    %s565 = scalar_lea.vmem [#allocation7], 272
    %v566 = vld [vmem:[%s565] sm:$0xff]
    %v567 = vsel %vm527, %v566, %v519
    %v568 = vsel %vm528, %v566, %v520
    %v569 = vsel %vm529, %v566, %v521
    %v570 = vsel %vm530, %v566, %v522
    %v571 = vsel %vm531, %v566, %v523
    %v572 = vsel %vm532, %v566, %v524
    %v573 = vsel %vm533, %v566, %v525
    %v574 = vsel %vm534, %v566, %v526
    %vm575 = vcmp.eq.f32.partialorder %v216, 8.0
    %vm576 = vcmp.eq.f32.partialorder %v217, 8.0
    %vm577 = vcmp.eq.f32.partialorder %v218, 8.0
    %vm578 = vcmp.eq.f32.partialorder %v219, 8.0
    %vm579 = vcmp.eq.f32.partialorder %v220, 8.0
    %vm580 = vcmp.eq.f32.partialorder %v221, 8.0
    %vm581 = vcmp.eq.f32.partialorder %v222, 8.0
    %vm582 = vcmp.eq.f32.partialorder %v223, 8.0
    %s583 = scalar_lea.vmem [#allocation7], 64
    %v584 = vld [vmem:[%s583] sm:$0xff]
    %v585 = vsel %vm575, %v584, %v537
    %v586 = vsel %vm576, %v584, %v538
    %v587 = vsel %vm577, %v584, %v539
    %v588 = vsel %vm578, %v584, %v540
    %v589 = vsel %vm579, %v584, %v541
    %v590 = vsel %vm580, %v584, %v542
    %v591 = vsel %vm581, %v584, %v543
    %v592 = vsel %vm582, %v584, %v544
    %s593 = scalar_lea.vmem [#allocation7], 136
    %v594 = vld [vmem:[%s593] sm:$0xff]
    %v595 = vsel %vm575, %v594, %v547
    %v596 = vsel %vm576, %v594, %v548
    %v597 = vsel %vm577, %v594, %v549
    %v598 = vsel %vm578, %v594, %v550
    %v599 = vsel %vm579, %v594, %v551
    %v600 = vsel %vm580, %v594, %v552
    %v601 = vsel %vm581, %v594, %v553
    %v602 = vsel %vm582, %v594, %v554
    %s603 = scalar_lea.vmem [#allocation7], 208
    %v604 = vld [vmem:[%s603] sm:$0xff]
    %v605 = vsel %vm575, %v604, %v557
    %v606 = vsel %vm576, %v604, %v558
    %v607 = vsel %vm577, %v604, %v559
    %v608 = vsel %vm578, %v604, %v560
    %v609 = vsel %vm579, %v604, %v561
    %v610 = vsel %vm580, %v604, %v562
    %v611 = vsel %vm581, %v604, %v563
    %v612 = vsel %vm582, %v604, %v564
    %s613 = scalar_lea.vmem [#allocation7], 280
    %v614 = vld [vmem:[%s613] sm:$0xff]
    %v615 = vsel %vm575, %v614, %v567
    %v616 = vsel %vm576, %v614, %v568
    %v617 = vsel %vm577, %v614, %v569
    %v618 = vsel %vm578, %v614, %v570
    %v619 = vsel %vm579, %v614, %v571
    %v620 = vsel %vm580, %v614, %v572
    %v621 = vsel %vm581, %v614, %v573
    %v622 = vsel %vm582, %v614, %v574
    %v623 = vmul.f32 %v224, %v615
    %v624 = vmul.f32 %v225, %v616
    %v625 = vmul.f32 %v226, %v617
    %v626 = vmul.f32 %v227, %v618
    %v627 = vmul.f32 %v228, %v619
    %v628 = vmul.f32 %v229, %v620
    %v629 = vmul.f32 %v230, %v621
    %v630 = vmul.f32 %v231, %v622
    %v631 = vadd.f32 %v605, %v623
    %v632 = vadd.f32 %v606, %v624
    %v633 = vadd.f32 %v607, %v625
    %v634 = vadd.f32 %v608, %v626
    %v635 = vadd.f32 %v609, %v627
    %v636 = vadd.f32 %v610, %v628
    %v637 = vadd.f32 %v611, %v629
    %v638 = vadd.f32 %v612, %v630
    %v639 = vmul.f32 %v224, %v631
    %v640 = vmul.f32 %v225, %v632
    %v641 = vmul.f32 %v226, %v633
    %v642 = vmul.f32 %v227, %v634
    %v643 = vmul.f32 %v228, %v635
    %v644 = vmul.f32 %v229, %v636
    %v645 = vmul.f32 %v230, %v637
    %v646 = vmul.f32 %v231, %v638
    %v647 = vadd.f32 %v595, %v639
    %v648 = vadd.f32 %v596, %v640
    %v649 = vadd.f32 %v597, %v641
    %v650 = vadd.f32 %v598, %v642
    %v651 = vadd.f32 %v599, %v643
    %v652 = vadd.f32 %v600, %v644
    %v653 = vadd.f32 %v601, %v645
    %v654 = vadd.f32 %v602, %v646
    %v655 = vmul.f32 %v224, %v647
    %v656 = vmul.f32 %v225, %v648
    %v657 = vmul.f32 %v226, %v649
    %v658 = vmul.f32 %v227, %v650
    %v659 = vmul.f32 %v228, %v651
    %v660 = vmul.f32 %v229, %v652
    %v661 = vmul.f32 %v230, %v653
    %v662 = vmul.f32 %v231, %v654
    %v663 = vadd.f32 %v585, %v655
    %v664 = vadd.f32 %v586, %v656
    %v665 = vadd.f32 %v587, %v657
    %v666 = vadd.f32 %v588, %v658
    %v667 = vadd.f32 %v589, %v659
    %v668 = vadd.f32 %v590, %v660
    %v669 = vadd.f32 %v591, %v661
    %v670 = vadd.f32 %v592, %v662
    %671 = vadd.xlane.f32.xlu0 %v663
    %v672 = vpop.xlane.xlu0 %671
    %673 = vadd.xlane.f32.xlu0 %v664
    %v674 = vpop.xlane.xlu0 %673
    %675 = vadd.xlane.f32.xlu0 %v665
    %v676 = vpop.xlane.xlu0 %675
    %677 = vadd.xlane.f32.xlu0 %v666
    %v678 = vpop.xlane.xlu0 %677
    %679 = vadd.xlane.f32.xlu0 %v667
    %v680 = vpop.xlane.xlu0 %679
    %681 = vadd.xlane.f32.xlu0 %v668
    %v682 = vpop.xlane.xlu0 %681
    %683 = vadd.xlane.f32.xlu0 %v669
    %v684 = vpop.xlane.xlu0 %683
    %685 = vadd.xlane.f32.xlu0 %v670
    %v686 = vpop.xlane.xlu0 %685
    %v687 = vld [vmem:[#allocation8] sm:$0xff]
    %v696 = vlaneseq
    %v697 = vand.u32 %v696, 127
    %v698 = vlaneseq
    %v699 = vshrl.u32 %v698, 7
    %v700 = vsub.s32 %v697, %v699
    %v701 = vrot.slane %v672, %v700
    %v702 = vlaneseq
    %v703 = vshrl.u32 %v702, 7
    %v704 = vsub.s32 %v697, %v703
    %v705 = vrot.slane %v674, %v704
    %v706 = vlaneseq
    %v707 = vshrl.u32 %v706, 7
    %v708 = vsub.s32 %v697, %v707
    %v709 = vrot.slane %v676, %v708
    %v710 = vlaneseq
    %v711 = vshrl.u32 %v710, 7
    %v712 = vsub.s32 %v697, %v711
    %v713 = vrot.slane %v678, %v712
    %v714 = vlaneseq
    %v715 = vshrl.u32 %v714, 7
    %v716 = vsub.s32 %v697, %v715
    %v717 = vrot.slane %v680, %v716
    %v718 = vlaneseq
    %v719 = vshrl.u32 %v718, 7
    %v720 = vsub.s32 %v697, %v719
    %v721 = vrot.slane %v682, %v720
    %v722 = vlaneseq
    %v723 = vshrl.u32 %v722, 7
    %v724 = vsub.s32 %v697, %v723
    %v725 = vrot.slane %v684, %v724
    %v726 = vlaneseq
    %v727 = vshrl.u32 %v726, 7
    %v728 = vsub.s32 %v697, %v727
    %v729 = vrot.slane %v686, %v728
    %vm730 = vcmask 1041409
    %v731 = vsel %vm730, %v705, %v701
    %vm732 = vcmask 1042434
    %v733 = vsel %vm732, %v709, %v731
    %vm734 = vcmask 1043459
    %v735 = vsel %vm734, %v713, %v733
    %vm736 = vcmask 1044484
    %v737 = vsel %vm736, %v717, %v735
    %vm738 = vcmask 1045509
    %v739 = vsel %vm738, %v721, %v737
    %vm740 = vcmask 1046534
    %v741 = vsel %vm740, %v725, %v739
    %vm742 = vcmask 1047559
    %v743 = vsel %vm742, %v729, %v741
    %v745 = vadd.f32 %v687, %v743
    %vm746 = vcmask 64512
    %747 = vst.msk [vmem:[#allocation8] sm:$0xff] %vm746, %v745
    // Predicated region
    $region34: #{tpu_custom_call.1} parent=1 // pred_check
      _
    $region35: #{tpu_custom_call.1} parent=1 // pred_check_branch
      %749 = sbr.rel (0) target = $region37
    $region36: #{tpu_custom_call.1} parent=1 // pred_region
      %s751 = ssub.s32 128, 128
      %752 = vsyncadd [#allocation4], %s751
      %s754 = sshll.u32 [#allocation8], 4
      %s755 = int_to_ptr.vmem [resolvable:$true] %s754
      %757 = dma.vmem_to_hbm [thread:$0]  %s755, 128, %s4, [#allocation4]
    $region37: #{tpu_custom_call.1} parent=1 // pred_fallthru
      _
    // Predicated region
    $region38: #{tpu_custom_call.1} parent=1 // pred_check
      _
    $region39: #{tpu_custom_call.1} parent=1 // pred_check_branch
      %759 = sbr.rel (0) target = $region41
    $region40: #{tpu_custom_call.1} parent=1 // pred_region
      %760 = dma.done [#allocation4], 128
    $region41: #{tpu_custom_call.1} parent=1 // pred_fallthru
      _
    %761 = vsyncpa [#allocation3], 1
    %762 = vsyncpa [#allocation6], 1
    %763 = vsyncpa [#allocation4], 1

</llo_original>
